<compile_context>
chip_gen: v6e
topology: v6e:2x2x1
jax: 0.10.0
libtpu: 0.0.40
codegen_flags: <defaults>
</compile_context>

<pallas_src>
import jax
import jax.numpy as jnp
from jax.experimental import pallas as pl
from jax.experimental.pallas import tpu as pltpu


def _round_up(x, m):
    return (x + m - 1) // m * m


def _vmem_capacity_bytes():
    """Physical VMEM per TensorCore (64 MiB on v7x, 128 MiB on v5e/v6e)."""
    try:
        return int(pltpu.get_tpu_info().vmem_capacity_bytes)
    except Exception:
        return 64 * 1024 * 1024  # conservative (v7x) default


def _mlp_kernel(x_ref, w1_ref, b1_ref, w2_ref, b2_ref, o_ref):
    # morgan_fp.float(): widen the streamed int8/bf16 tile. MXU operands are
    # bf16 (full-rate on v5e/v6e/v7x); accumulation + epilogue stay in f32.
    x = x_ref[...].astype(jnp.bfloat16)                               # (TB, F_pad)

    # Linear(node_in_feats -> node_hidden_feats) + ReLU  (f32 epilogue)
    h = jnp.dot(x, w1_ref[...], preferred_element_type=jnp.float32)   # (TB, H_pad) f32
    h = jnp.maximum(h + b1_ref[...], 0.0)

    # Dropout -> identity (eval mode).
    # TODO(synk): training-mode dropout mask (pltpu.prng_seed / prng_random_bits) not emitted.

    # Linear(node_hidden_feats -> label_n)
    out = jnp.dot(h.astype(jnp.bfloat16), w2_ref[...],
                  preferred_element_type=jnp.float32)                 # (TB, L_pad) f32
    o_ref[...] = (out + b2_ref[...]).astype(o_ref.dtype)


def prepare_params(w1, b1, w2, b2):
    """One-time (init-time) pad + cast of the weights.

    w1: (F_in, H), b1: (H,), w2: (H, L), b2: (L,)  -- transposed (in, out)
    layout vs PyTorch nn.Linear's (out, in). Lane dims are zero-padded to
    multiples of 128 and the matmul operands cast to bf16 exactly once here,
    so the per-forward-call path carries no weight pad/cast XLA ops.
    """
    F_in, H = w1.shape
    L = w2.shape[1]
    F_pad = _round_up(F_in, 128)
    H_pad = _round_up(H, 128)
    L_pad = _round_up(L, 128)
    w1p = jnp.pad(jnp.asarray(w1, jnp.float32),
                  ((0, F_pad - F_in), (0, H_pad - H))).astype(jnp.bfloat16)
    b1p = jnp.pad(jnp.asarray(b1, jnp.float32), (0, H_pad - H)).reshape(1, H_pad)
    w2p = jnp.pad(jnp.asarray(w2, jnp.float32),
                  ((0, H_pad - H), (0, L_pad - L))).astype(jnp.bfloat16)
    b2p = jnp.pad(jnp.asarray(b2, jnp.float32), (0, L_pad - L)).reshape(1, L_pad)
    return {
        "w1": w1p, "b1": b1p, "w2": w2p, "b2": b2p,
        "F_in": F_in, "H": H, "L": L,
        "F_pad": F_pad, "H_pad": H_pad, "L_pad": L_pad,
    }


def molecular_fp_forward(morgan_fp, params, *, batch_tile=1024):
    """morgan_fp: (B, F_in); params: output of prepare_params(). Returns (B, L) f32."""
    B, F_in = morgan_fp.shape
    assert F_in == params["F_in"], "fingerprint width mismatch vs prepared params"
    F_pad, H_pad, L_pad, L = params["F_pad"], params["H_pad"], params["L_pad"], params["L"]

    # --- streamed-input dtype: binary morgan fingerprints are exact in int8 /
    # bf16; this shrinks the only per-grid-step HBM stream (widening in-kernel).
    if jnp.issubdtype(morgan_fp.dtype, jnp.integer) or morgan_fp.dtype == jnp.bool_:
        x = morgan_fp.astype(jnp.int8)
        sublane = 32          # int8 sublane packing
    else:
        x = morgan_fp.astype(jnp.bfloat16)
        sublane = 16          # bf16 sublane packing

    # --- per-generation VMEM budget: v7x has 64 MiB per TC, v5e/v6e have 128.
    vmem_cap = _vmem_capacity_bytes()
    if vmem_cap <= 64 * 1024 * 1024:      # v7x-class
        max_tile, vmem_limit = 1024, 48 * 1024 * 1024
    else:                                  # v5e / v6e
        max_tile, vmem_limit = 2048, 96 * 1024 * 1024

    # --- effective batch tile: cap by budget and (padded) B, keep it a
    # multiple of the input dtype's sublane packing.
    eff_tile = min(batch_tile, max_tile, _round_up(B, sublane))
    eff_tile = _round_up(eff_tile, sublane)
    B_pad = _round_up(B, eff_tile)

    # --- guarantee >=2 grid steps when the batch permits, so the 'parallel'
    # batch axis actually feeds both TensorCores on v7x.
    if B_pad // eff_tile < 2 and B_pad >= 2 * sublane:
        eff_tile = _round_up(pl.cdiv(B_pad, 2), sublane)
        B_pad = _round_up(B, eff_tile)

    x = jnp.pad(x, ((0, B_pad - B), (0, F_pad - F_in)))
    grid = (B_pad // eff_tile,)

    def _call(single_buffer_weights):
        # Resident operands have a constant index_map; single-buffer them to
        # avoid allocating two VMEM copies of every weight.
        wkw = {"pipeline_mode": pl.Buffered(1)} if single_buffer_weights else {}
        in_specs = [
            pl.BlockSpec((eff_tile, F_pad), lambda i: (i, 0)),        # x tile (streamed)
            pl.BlockSpec((F_pad, H_pad), lambda i: (0, 0), **wkw),    # W1 (resident)
            pl.BlockSpec((1, H_pad), lambda i: (0, 0), **wkw),        # b1 (resident)
            pl.BlockSpec((H_pad, L_pad), lambda i: (0, 0), **wkw),    # W2 (resident)
            pl.BlockSpec((1, L_pad), lambda i: (0, 0), **wkw),        # b2 (resident)
        ]
        return pl.pallas_call(
            _mlp_kernel,
            out_shape=jax.ShapeDtypeStruct((B_pad, L_pad), jnp.float32),
            grid_spec=pltpu.PrefetchScalarGridSpec(
                num_scalar_prefetch=0,
                grid=grid,
                in_specs=in_specs,
                out_specs=pl.BlockSpec((eff_tile, L_pad), lambda i: (i, 0)),
            ),
            compiler_params=pltpu.CompilerParams(
                dimension_semantics=("parallel",),   # batch axis shards across TCs
                vmem_limit_bytes=vmem_limit,
            ),
        )(x, params["w1"], params["b1"], params["w2"], params["b2"])

    try:
        out = _call(True)
    except Exception:
        # Older JAX without Buffered(1) support: fall back to default buffering.
        out = _call(False)

    # Slice away batch / label padding.
    return out[:B, :L]


def _reference(morgan_fp, w1, b1, w2, b2):
    x = morgan_fp.astype(jnp.float32)
    h = jnp.maximum(x @ w1 + b1, 0.0)
    return h @ w2 + b2


if __name__ == "__main__":
    # Small shapes consistent with the module:
    #   node_in_feats=128 (morgan fp bits), node_hidden_feats=64, label_n=16, batch=8
    B, F_IN, HID, LBL = 8, 128, 64, 16

    key = jax.random.PRNGKey(0)
    k_x, k_w1, k_b1, k_w2, k_b2 = jax.random.split(key, 5)

    # Binary morgan fingerprint stored as int32; kernel applies .float().
    morgan_fp = jax.random.bernoulli(k_x, p=0.3, shape=(B, F_IN)).astype(jnp.int32)

    # Deterministic parameter init (kernel-friendly transposed layout (in, out)).
    w1 = (jax.random.uniform(k_w1, (F_IN, HID), jnp.float32) - 0.5) * (2.0 / jnp.sqrt(F_IN))
    b1 = (jax.random.uniform(k_b1, (HID,), jnp.float32) - 0.5) * (2.0 / jnp.sqrt(F_IN))
    w2 = (jax.random.uniform(k_w2, (HID, LBL), jnp.float32) - 0.5) * (2.0 / jnp.sqrt(HID))
    b2 = (jax.random.uniform(k_b2, (LBL,), jnp.float32) - 0.5) * (2.0 / jnp.sqrt(HID))

    params = prepare_params(w1, b1, w2, b2)     # one-time init-time pad/cast
    out = molecular_fp_forward(morgan_fp, params)
    out = jax.block_until_ready(out)

    ref = _reference(morgan_fp, w1, b1, w2, b2)
    assert out.shape == (B, LBL)
    # bf16 MXU operands (f32 accumulate) -> slightly looser tolerance vs pure-f32 ref.
    assert jnp.allclose(out, ref, atol=2e-2, rtol=2e-2), "mismatch vs reference"

    print("KERNEL_OK")
</pallas_src>

<mosaic_0001>
module attributes {stable_mosaic.version = 11 : i64} {
  func.func @_mlp_kernel(%arg0: i32, %arg1: memref<32x128xi8, #tpu.memory_space<vmem>>, %arg2: memref<128x128xbf16, #tpu.memory_space<vmem>>, %arg3: memref<1x128xf32, #tpu.memory_space<vmem>>, %arg4: memref<128x128xbf16, #tpu.memory_space<vmem>>, %arg5: memref<1x128xf32, #tpu.memory_space<vmem>>, %arg6: memref<32x128xf32, #tpu.memory_space<vmem>>) attributes {dimension_semantics = [#tpu.dimension_semantics<parallel>], iteration_bounds = array<i64: 1>, scalar_prefetch = 0 : i64, scratch_operands = 0 : i64, tpu.core_type = #tpu.core_type<tc>, window_params = [{transform_indices = @transform_0, window_bounds = array<i64: 32, 128>}, {pipeline_mode = #tpu.pipeline_mode<synchronous>, transform_indices = @transform_1, window_bounds = array<i64: 128, 128>}, {pipeline_mode = #tpu.pipeline_mode<synchronous>, transform_indices = @transform_2, window_bounds = array<i64: 1, 128>}, {pipeline_mode = #tpu.pipeline_mode<synchronous>, transform_indices = @transform_3, window_bounds = array<i64: 128, 128>}, {pipeline_mode = #tpu.pipeline_mode<synchronous>, transform_indices = @transform_4, window_bounds = array<i64: 1, 128>}, {transform_indices = @transform_5, window_bounds = array<i64: 32, 128>}]} {
    %c0 = arith.constant 0 : index
    %c0_0 = arith.constant 0 : index
    %0 = vector.load %arg1[%c0, %c0_0] : memref<32x128xi8, #tpu.memory_space<vmem>>, vector<32x128xi8>
    %1 = arith.sitofp %0 : vector<32x128xi8> to vector<32x128xbf16>
    %c0_1 = arith.constant 0 : index
    %c0_2 = arith.constant 0 : index
    %2 = vector.load %arg2[%c0_1, %c0_2] : memref<128x128xbf16, #tpu.memory_space<vmem>>, vector<128x128xbf16>
    %cst = arith.constant dense<0.000000e+00> : vector<32x128xf32>
    %3 = tpu.matmul %1, %2, %cst {dimension_numbers = #tpu.dot_dimension_numbers<[1], [0], [0], [1], [0, 0, 1, 1], [], []>} : vector<32x128xbf16>, vector<128x128xbf16>, vector<32x128xf32> -> vector<32x128xf32>
    %c0_3 = arith.constant 0 : index
    %c0_4 = arith.constant 0 : index
    %4 = vector.load %arg3[%c0_3, %c0_4] : memref<1x128xf32, #tpu.memory_space<vmem>>, vector<1x128xf32>
    %5 = vector.broadcast %4 : vector<1x128xf32> to vector<32x128xf32>
    %6 = arith.addf %3, %5 : vector<32x128xf32>
    %cst_5 = arith.constant 0.000000e+00 : f32
    %7 = vector.broadcast %cst_5 : f32 to vector<32x128xf32>
    %8 = arith.maximumf %6, %7 : vector<32x128xf32>
    %9 = arith.truncf %8 : vector<32x128xf32> to vector<32x128xbf16>
    %c0_6 = arith.constant 0 : index
    %c0_7 = arith.constant 0 : index
    %10 = vector.load %arg4[%c0_6, %c0_7] : memref<128x128xbf16, #tpu.memory_space<vmem>>, vector<128x128xbf16>
    %cst_8 = arith.constant dense<0.000000e+00> : vector<32x128xf32>
    %11 = tpu.matmul %9, %10, %cst_8 {dimension_numbers = #tpu.dot_dimension_numbers<[1], [0], [0], [1], [0, 0, 1, 1], [], []>} : vector<32x128xbf16>, vector<128x128xbf16>, vector<32x128xf32> -> vector<32x128xf32>
    %c0_9 = arith.constant 0 : index
    %c0_10 = arith.constant 0 : index
    %12 = vector.load %arg5[%c0_9, %c0_10] : memref<1x128xf32, #tpu.memory_space<vmem>>, vector<1x128xf32>
    %13 = vector.broadcast %12 : vector<1x128xf32> to vector<32x128xf32>
    %14 = arith.addf %11, %13 : vector<32x128xf32>
    %c0_11 = arith.constant 0 : index
    %c0_12 = arith.constant 0 : index
    %15 = vector.load %arg6[%c0_11, %c0_12] : memref<32x128xf32, #tpu.memory_space<vmem>>, vector<32x128xf32>
    tpu.vector_store %arg6[%c0_11, %c0_12], %14 {strides = array<i32>} : memref<32x128xf32, #tpu.memory_space<vmem>>, vector<32x128xf32>,
    return
  }
  func.func @transform_0(%arg0: i32) -> (i32, i32) {
    %c0_i32 = arith.constant 0 : i32
    %c0_i32_0 = arith.constant 0 : i32
    return %arg0, %c0_i32 : i32, i32
  }
  func.func @transform_1(%arg0: i32) -> (i32, i32) {
    %c0_i32 = arith.constant 0 : i32
    %c0_i32_0 = arith.constant 0 : i32
    %c0_i32_1 = arith.constant 0 : i32
    return %c0_i32, %c0_i32_0 : i32, i32
  }
  func.func @transform_2(%arg0: i32) -> (i32, i32) {
    %c0_i32 = arith.constant 0 : i32
    %c0_i32_0 = arith.constant 0 : i32
    %c0_i32_1 = arith.constant 0 : i32
    return %c0_i32, %c0_i32_0 : i32, i32
  }
  func.func @transform_3(%arg0: i32) -> (i32, i32) {
    %c0_i32 = arith.constant 0 : i32
    %c0_i32_0 = arith.constant 0 : i32
    %c0_i32_1 = arith.constant 0 : i32
    return %c0_i32, %c0_i32_0 : i32, i32
  }
  func.func @transform_4(%arg0: i32) -> (i32, i32) {
    %c0_i32 = arith.constant 0 : i32
    %c0_i32_0 = arith.constant 0 : i32
    %c0_i32_1 = arith.constant 0 : i32
    return %c0_i32, %c0_i32_0 : i32, i32
  }
  func.func @transform_5(%arg0: i32) -> (i32, i32) {
    %c0_i32 = arith.constant 0 : i32
    %c0_i32_0 = arith.constant 0 : i32
    return %arg0, %c0_i32 : i32, i32
  }
}

module attributes {stable_mosaic.version = 11 : i64} {
  func.func @_mlp_kernel(%arg0: i32, %arg1: memref<32x128xi8, #tpu.memory_space<vmem>>, %arg2: memref<128x128xbf16, #tpu.memory_space<vmem>>, %arg3: memref<1x128xf32, #tpu.memory_space<vmem>>, %arg4: memref<128x128xbf16, #tpu.memory_space<vmem>>, %arg5: memref<1x128xf32, #tpu.memory_space<vmem>>, %arg6: memref<32x128xf32, #tpu.memory_space<vmem>>) attributes {dimension_semantics = [#tpu.dimension_semantics<parallel>], iteration_bounds = array<i64: 1>, scalar_prefetch = 0 : i64, scratch_operands = 0 : i64, tpu.core_type = #tpu.core_type<tc>, window_params = [{transform_indices = @transform_0, window_bounds = array<i64: 32, 128>}, {pipeline_mode = #tpu.pipeline_mode<synchronous>, transform_indices = @transform_1, window_bounds = array<i64: 128, 128>}, {pipeline_mode = #tpu.pipeline_mode<synchronous>, transform_indices = @transform_2, window_bounds = array<i64: 1, 128>}, {pipeline_mode = #tpu.pipeline_mode<synchronous>, transform_indices = @transform_3, window_bounds = array<i64: 128, 128>}, {pipeline_mode = #tpu.pipeline_mode<synchronous>, transform_indices = @transform_4, window_bounds = array<i64: 1, 128>}, {transform_indices = @transform_5, window_bounds = array<i64: 32, 128>}]} {
    %c0 = arith.constant 0 : index
    %c0_0 = arith.constant 0 : index
    %0 = vector.load %arg1[%c0, %c0_0] : memref<32x128xi8, #tpu.memory_space<vmem>>, vector<32x128xi8>
    %1 = arith.sitofp %0 : vector<32x128xi8> to vector<32x128xbf16>
    %c0_1 = arith.constant 0 : index
    %c0_2 = arith.constant 0 : index
    %2 = vector.load %arg2[%c0_1, %c0_2] : memref<128x128xbf16, #tpu.memory_space<vmem>>, vector<128x128xbf16>
    %cst = arith.constant dense<0.000000e+00> : vector<32x128xf32>
    %3 = tpu.matmul %1, %2, %cst {dimension_numbers = #tpu.dot_dimension_numbers<[1], [0], [0], [1], [0, 0, 1, 1], [], []>} : vector<32x128xbf16>, vector<128x128xbf16>, vector<32x128xf32> -> vector<32x128xf32>
    %c0_3 = arith.constant 0 : index
    %c0_4 = arith.constant 0 : index
    %4 = vector.load %arg3[%c0_3, %c0_4] : memref<1x128xf32, #tpu.memory_space<vmem>>, vector<1x128xf32>
    %5 = vector.broadcast %4 : vector<1x128xf32> to vector<32x128xf32>
    %6 = arith.addf %3, %5 : vector<32x128xf32>
    %cst_5 = arith.constant 0.000000e+00 : f32
    %7 = vector.broadcast %cst_5 : f32 to vector<32x128xf32>
    %8 = arith.maximumf %6, %7 : vector<32x128xf32>
    %9 = arith.truncf %8 : vector<32x128xf32> to vector<32x128xbf16>
    %c0_6 = arith.constant 0 : index
    %c0_7 = arith.constant 0 : index
    %10 = vector.load %arg4[%c0_6, %c0_7] : memref<128x128xbf16, #tpu.memory_space<vmem>>, vector<128x128xbf16>
    %cst_8 = arith.constant dense<0.000000e+00> : vector<32x128xf32>
    %11 = tpu.matmul %9, %10, %cst_8 {dimension_numbers = #tpu.dot_dimension_numbers<[1], [0], [0], [1], [0, 0, 1, 1], [], []>} : vector<32x128xbf16>, vector<128x128xbf16>, vector<32x128xf32> -> vector<32x128xf32>
    %c0_9 = arith.constant 0 : index
    %c0_10 = arith.constant 0 : index
    %12 = vector.load %arg5[%c0_9, %c0_10] : memref<1x128xf32, #tpu.memory_space<vmem>>, vector<1x128xf32>
    %13 = vector.broadcast %12 : vector<1x128xf32> to vector<32x128xf32>
    %14 = arith.addf %11, %13 : vector<32x128xf32>
    %c0_11 = arith.constant 0 : index
    %c0_12 = arith.constant 0 : index
    %15 = vector.load %arg6[%c0_11, %c0_12] : memref<32x128xf32, #tpu.memory_space<vmem>>, vector<32x128xf32>
    tpu.vector_store %arg6[%c0_11, %c0_12], %14 {strides = array<i32>} : memref<32x128xf32, #tpu.memory_space<vmem>>, vector<32x128xf32>,
    return
  }
  func.func @transform_0(%arg0: i32) -> (i32, i32) {
    %c0_i32 = arith.constant 0 : i32
    %c0_i32_0 = arith.constant 0 : i32
    return %arg0, %c0_i32 : i32, i32
  }
  func.func @transform_1(%arg0: i32) -> (i32, i32) {
    %c0_i32 = arith.constant 0 : i32
    %c0_i32_0 = arith.constant 0 : i32
    %c0_i32_1 = arith.constant 0 : i32
    return %c0_i32, %c0_i32_0 : i32, i32
  }
  func.func @transform_2(%arg0: i32) -> (i32, i32) {
    %c0_i32 = arith.constant 0 : i32
    %c0_i32_0 = arith.constant 0 : i32
    %c0_i32_1 = arith.constant 0 : i32
    return %c0_i32, %c0_i32_0 : i32, i32
  }
  func.func @transform_3(%arg0: i32) -> (i32, i32) {
    %c0_i32 = arith.constant 0 : i32
    %c0_i32_0 = arith.constant 0 : i32
    %c0_i32_1 = arith.constant 0 : i32
    return %c0_i32, %c0_i32_0 : i32, i32
  }
  func.func @transform_4(%arg0: i32) -> (i32, i32) {
    %c0_i32 = arith.constant 0 : i32
    %c0_i32_0 = arith.constant 0 : i32
    %c0_i32_1 = arith.constant 0 : i32
    return %c0_i32, %c0_i32_0 : i32, i32
  }
  func.func @transform_5(%arg0: i32) -> (i32, i32) {
    %c0_i32 = arith.constant 0 : i32
    %c0_i32_0 = arith.constant 0 : i32
    return %arg0, %c0_i32 : i32, i32
  }
}

</mosaic_0001>

<llo_original>
// kernel: tpu_custom_call.1
$region0: #{tpu_custom_call.1}
  #allocation0 [shape = 'u32[]', space=smem, size = 0x4, offset = 0x4, fixed_abs, tag = 'smem constant byte address 0x4 - core index']
  #allocation1 [shape = 'u32[144,128]{1,0:T(1,128)}', space=vmem, size = 0x12000, scoped, tag = 'internal scratch']
  %s0 = inlined_call_operand.hbm [shape: s8[32,128], index: 0, kind: input, shape index: {}]
  %s1 = inlined_call_operand.hbm [shape: bf16[128,128], index: 1, kind: input, shape index: {}]
  %s2 = inlined_call_operand.vmem [shape: f32[1,128], index: 2, kind: input, shape index: {}]
  %s3 = inlined_call_operand.hbm [shape: bf16[128,128], index: 3, kind: input, shape index: {}]
  %s4 = inlined_call_operand.vmem [shape: f32[1,128], index: 4, kind: input, shape index: {}]
  %s5 = inlined_call_operand.hbm [shape: f32[32,128], index: 5, kind: output, shape index: {}]
  %s6 = sld [smem:[#allocation0]]
  $region42: #{tpu_custom_call.1} parent=0
    _
  %s8 = ssub.s32 1, %s6
  %s9 = scalar_select 0, %s8, %s6
  $region1: #{tpu_custom_call.1} parent=0
    #allocation2 [shape = 'u8[4096]{0}', space=vmem, size = 0x1000, scoped, tag = 'input window, operand 0, single buffered']
    #allocation3 [shape = 's32[1]{0}', space=sflag, size = 0x4, scoped, tag = 'scoped memory for tpu_custom_call.1']
    #allocation4 [shape = 's32[1]{0}', space=sflag, size = 0x4, scoped, tag = 'scoped memory for tpu_custom_call.1']
    #allocation5 [shape = 'u8[32768]{0}', space=vmem, size = 0x8000, scoped, tag = 'input window, operand 1, single buffered']
    #allocation6 [shape = 's32[1]{0}', space=sflag, size = 0x4, scoped, tag = 'scoped memory for tpu_custom_call.1']
    #allocation7 [shape = 'u8[32768]{0}', space=vmem, size = 0x8000, scoped, tag = 'input window, operand 3, single buffered']
    #allocation8 [shape = 'u8[16384]{0}', space=vmem, size = 0x4000, scoped, tag = 'output window, operand 0, single buffered']
    %10 = vsyncpa [#allocation3], 0
    %11 = vsyncpa [#allocation6], 0
    %12 = vsyncpa [#allocation4], 0
    // Predicated region
    $region2: #{tpu_custom_call.1} parent=1 // pred_check
      _
    $region3: #{tpu_custom_call.1} parent=1 // pred_check_branch
      %14 = sbr.rel (0) target = $region5
    $region4: #{tpu_custom_call.1} parent=1 // pred_region
      %s16 = ssub.s32 128, 128
      %17 = vsyncadd [#allocation3], %s16
      %s19 = sshll.u32 [#allocation2], 4
      %s20 = int_to_ptr.vmem [resolvable:$true] %s19
      %22 = dma.hbm_to_vmem [thread:$0]  %s0, 128, %s20, [#allocation3]
    $region5: #{tpu_custom_call.1} parent=1 // pred_fallthru
      _
    // Predicated region
    $region6: #{tpu_custom_call.1} parent=1 // pred_check
      _
    $region7: #{tpu_custom_call.1} parent=1 // pred_check_branch
      %24 = sbr.rel (0) target = $region9
    $region8: #{tpu_custom_call.1} parent=1 // pred_region
      %s26 = ssub.s32 1024, 1024
      %27 = vsyncadd [#allocation6], %s26
      %s28 = sshll.u32 [#allocation5], 4
      %s29 = int_to_ptr.vmem [resolvable:$true] %s28
      %34 = dma.hbm_to_vmem [thread:$0]  %s1, 1024, %s29, [#allocation6], 64, 64, 4
    $region9: #{tpu_custom_call.1} parent=1 // pred_fallthru
      _
    // Predicated region
    $region10: #{tpu_custom_call.1} parent=1 // pred_check
      _
    $region11: #{tpu_custom_call.1} parent=1 // pred_check_branch
      %36 = sbr.rel (0) target = $region13
    $region12: #{tpu_custom_call.1} parent=1 // pred_region
      _
    $region13: #{tpu_custom_call.1} parent=1 // pred_fallthru
      _
    // Predicated region
    $region14: #{tpu_custom_call.1} parent=1 // pred_check
      _
    $region15: #{tpu_custom_call.1} parent=1 // pred_check_branch
      %38 = sbr.rel (0) target = $region17
    $region16: #{tpu_custom_call.1} parent=1 // pred_region
      %s40 = ssub.s32 1024, 1024
      %41 = vsyncadd [#allocation6], %s40
      %s42 = sshll.u32 [#allocation7], 4
      %s43 = int_to_ptr.vmem [resolvable:$true] %s42
      %48 = dma.hbm_to_vmem [thread:$0]  %s3, 1024, %s43, [#allocation6], 64, 64, 4
    $region17: #{tpu_custom_call.1} parent=1 // pred_fallthru
      _
    // Predicated region
    $region18: #{tpu_custom_call.1} parent=1 // pred_check
      _
    $region19: #{tpu_custom_call.1} parent=1 // pred_check_branch
      %50 = sbr.rel (0) target = $region21
    $region20: #{tpu_custom_call.1} parent=1 // pred_region
      _
    $region21: #{tpu_custom_call.1} parent=1 // pred_fallthru
      _
    // Predicated region
    $region22: #{tpu_custom_call.1} parent=1 // pred_check
      _
    $region23: #{tpu_custom_call.1} parent=1 // pred_check_branch
      %52 = sbr.rel (0) target = $region25
    $region24: #{tpu_custom_call.1} parent=1 // pred_region
      %53 = dma.done [#allocation3], 128
    $region25: #{tpu_custom_call.1} parent=1 // pred_fallthru
      _
    // Predicated region
    $region26: #{tpu_custom_call.1} parent=1 // pred_check
      _
    $region27: #{tpu_custom_call.1} parent=1 // pred_check_branch
      %55 = sbr.rel (0) target = $region29
    $region28: #{tpu_custom_call.1} parent=1 // pred_region
      %56 = dma.done [#allocation6], 1024
    $region29: #{tpu_custom_call.1} parent=1 // pred_fallthru
      _
    // Predicated region
    $region30: #{tpu_custom_call.1} parent=1 // pred_check
      _
    $region31: #{tpu_custom_call.1} parent=1 // pred_check_branch
      %58 = sbr.rel (0) target = $region33
    $region32: #{tpu_custom_call.1} parent=1 // pred_region
      %59 = dma.done [#allocation6], 1024
    $region33: #{tpu_custom_call.1} parent=1 // pred_fallthru
      _
    %v61 = vld [vmem:[#allocation2] sm:$0xff]
    %v62 = vunpack.c.l.s8.bf16 %v61
    %v63 = vunpack.c.h.s8.bf16 %v61
    %v64 = vld [vmem:[#allocation5] sm:$0xf]
    %v65 = vld [vmem:[#allocation5 + $0x4] sm:$0xf]
    %v66 = vld [vmem:[#allocation5 + $0x8] sm:$0xf]
    %v67 = vld [vmem:[#allocation5 + $0xc] sm:$0xf]
    %v68 = vld [vmem:[#allocation5 + $0x10] sm:$0xf]
    %v69 = vld [vmem:[#allocation5 + $0x14] sm:$0xf]
    %v70 = vld [vmem:[#allocation5 + $0x18] sm:$0xf]
    %v71 = vld [vmem:[#allocation5 + $0x1c] sm:$0xf]
    %v72 = vld [vmem:[#allocation5 + $0x20] sm:$0xf]
    %v73 = vld [vmem:[#allocation5 + $0x24] sm:$0xf]
    %v74 = vld [vmem:[#allocation5 + $0x28] sm:$0xf]
    %v75 = vld [vmem:[#allocation5 + $0x2c] sm:$0xf]
    %v76 = vld [vmem:[#allocation5 + $0x30] sm:$0xf]
    %v77 = vld [vmem:[#allocation5 + $0x34] sm:$0xf]
    %v78 = vld [vmem:[#allocation5 + $0x38] sm:$0xf]
    %v79 = vld [vmem:[#allocation5 + $0x3c] sm:$0xf]
    %v80 = vld [vmem:[%s2] sm:$0x1]
    %v82 = vlaneseq
    %v83 = vshrl.u32 %v82, 7
    %v84 = vsub.s32 0, %v83
    %v85 = vrot.slane %v80, %v84
    %v103 = vunpack.c.l.b16 %v64
    %v104 = vunpack.c.l.b16 %v65
    %v105 = vunpack.c.l.b16 %v66
    %v106 = vunpack.c.l.b16 %v67
    %v107 = vunpack.c.l.b16 %v68
    %v108 = vunpack.c.l.b16 %v69
    %v109 = vunpack.c.l.b16 %v70
    %v110 = vunpack.c.l.b16 %v71
    %v111 = vunpack.c.l.b16 %v72
    %v112 = vunpack.c.l.b16 %v73
    %v113 = vunpack.c.l.b16 %v74
    %v114 = vunpack.c.l.b16 %v75
    %v115 = vunpack.c.l.b16 %v76
    %v116 = vunpack.c.l.b16 %v77
    %v117 = vunpack.c.l.b16 %v78
    %v118 = vunpack.c.l.b16 %v79
    %v119 = vpack.c.b16 %v104, %v103
    %v120 = vpack.c.b16 %v106, %v105
    %v121 = vpack.c.b16 %v108, %v107
    %v122 = vpack.c.b16 %v110, %v109
    %v123 = vpack.c.b16 %v112, %v111
    %v124 = vpack.c.b16 %v114, %v113
    %v125 = vpack.c.b16 %v116, %v115
    %v126 = vpack.c.b16 %v118, %v117
    %135 = vmatprep.subr.bf16.mxu0 0
    %136 = vmatpush1.bf16.msra.mxu0 %v126
    %137 = vmatprep.subr.bf16.mxu0 0
    %138 = vmatpush1.bf16.msra.mxu0 %v125
    %139 = vmatprep.subr.bf16.mxu0 0
    %140 = vmatpush1.bf16.msra.mxu0 %v124
    %141 = vmatprep.subr.bf16.mxu0 0
    %142 = vmatpush1.bf16.msra.mxu0 %v123
    %143 = vmatprep.subr.bf16.mxu0 0
    %144 = vmatpush1.bf16.msra.mxu0 %v122
    %145 = vmatprep.subr.bf16.mxu0 0
    %146 = vmatpush1.bf16.msra.mxu0 %v121
    %147 = vmatprep.subr.bf16.mxu0 0
    %148 = vmatpush1.bf16.msra.mxu0 %v120
    %149 = vmatprep.subr.bf16.mxu0 0
    %150 = vmatpush1.bf16.msra.mxu0 %v119
    %151 = vmatprep.subr.bf16.mxu0 0
    %152 = vmatpush2.bf16.msra.mxu0 0
    %153 = vmatprep.subr.bf16.mxu0 0
    %154 = vmatpush2.bf16.msra.mxu0 0
    %155 = vmatprep.subr.bf16.mxu0 0
    %156 = vmatpush2.bf16.msra.mxu0 0
    %157 = vmatprep.subr.bf16.mxu0 0
    %158 = vmatpush2.bf16.msra.mxu0 0
    %159 = vmatprep.subr.bf16.mxu0 0
    %160 = vmatpush2.bf16.msra.mxu0 0
    %161 = vmatprep.subr.bf16.mxu0 0
    %162 = vmatpush2.bf16.msra.mxu0 0
    %163 = vmatprep.subr.bf16.mxu0 0
    %164 = vmatpush2.bf16.msra.mxu0 0
    %165 = vmatprep.subr.bf16.mxu0 0
    %166 = vmatpush2.bf16.msra.mxu0 0
    %167 = vmatprep.mubr.bf16.mxu0 0
    %168 = vmatmul.mubr.bf16.gmra.mxu0 %v62
    %v169 = vpop.f32.mrf.mxu0
    %v170 = vadd.f32 %v85, %v169
    %v171 = vpop.f32.mrf.mxu0
    %v172 = vpop.f32.mrf.mxu0
    %v173 = vadd.f32 %v85, %v172
    %v174 = vpop.f32.mrf.mxu0
    %175 = vmatprep.mubr.bf16.mxu0 0
    %176 = vmatmul.mubr.bf16.gmra.mxu0 %v63
    %v177 = vpop.f32.mrf.mxu0
    %v178 = vadd.f32 %v85, %v177
    %v179 = vpop.f32.mrf.mxu0
    %v180 = vpop.f32.mrf.mxu0
    %v181 = vadd.f32 %v85, %v180
    %v182 = vpop.f32.mrf.mxu0
    %183 = vdwg.mxu0
    %v184 = vmax.f32 %v170, 0.0
    %v185 = vmax.f32 %v173, 0.0
    %v186 = vmax.f32 %v178, 0.0
    %v187 = vmax.f32 %v181, 0.0
    %v188 = vpack.c.bf16 %v185, %v184
    %v189 = vpack.c.bf16 %v187, %v186
    %v190 = vld [vmem:[#allocation7] sm:$0xf]
    %v191 = vld [vmem:[#allocation7 + $0x4] sm:$0xf]
    %v192 = vld [vmem:[#allocation7 + $0x8] sm:$0xf]
    %v193 = vld [vmem:[#allocation7 + $0xc] sm:$0xf]
    %v194 = vld [vmem:[#allocation7 + $0x10] sm:$0xf]
    %v195 = vld [vmem:[#allocation7 + $0x14] sm:$0xf]
    %v196 = vld [vmem:[#allocation7 + $0x18] sm:$0xf]
    %v197 = vld [vmem:[#allocation7 + $0x1c] sm:$0xf]
    %v198 = vld [vmem:[#allocation7 + $0x20] sm:$0xf]
    %v199 = vld [vmem:[#allocation7 + $0x24] sm:$0xf]
    %v200 = vld [vmem:[#allocation7 + $0x28] sm:$0xf]
    %v201 = vld [vmem:[#allocation7 + $0x2c] sm:$0xf]
    %v202 = vld [vmem:[#allocation7 + $0x30] sm:$0xf]
    %v203 = vld [vmem:[#allocation7 + $0x34] sm:$0xf]
    %v204 = vld [vmem:[#allocation7 + $0x38] sm:$0xf]
    %v205 = vld [vmem:[#allocation7 + $0x3c] sm:$0xf]
    %v206 = vld [vmem:[%s4] sm:$0x1]
    %v208 = vlaneseq
    %v209 = vshrl.u32 %v208, 7
    %v210 = vsub.s32 0, %v209
    %v211 = vrot.slane %v206, %v210
    %v229 = vunpack.c.l.b16 %v190
    %v230 = vunpack.c.l.b16 %v191
    %v231 = vunpack.c.l.b16 %v192
    %v232 = vunpack.c.l.b16 %v193
    %v233 = vunpack.c.l.b16 %v194
    %v234 = vunpack.c.l.b16 %v195
    %v235 = vunpack.c.l.b16 %v196
    %v236 = vunpack.c.l.b16 %v197
    %v237 = vunpack.c.l.b16 %v198
    %v238 = vunpack.c.l.b16 %v199
    %v239 = vunpack.c.l.b16 %v200
    %v240 = vunpack.c.l.b16 %v201
    %v241 = vunpack.c.l.b16 %v202
    %v242 = vunpack.c.l.b16 %v203
    %v243 = vunpack.c.l.b16 %v204
    %v244 = vunpack.c.l.b16 %v205
    %v245 = vpack.c.b16 %v230, %v229
    %v246 = vpack.c.b16 %v232, %v231
    %v247 = vpack.c.b16 %v234, %v233
    %v248 = vpack.c.b16 %v236, %v235
    %v249 = vpack.c.b16 %v238, %v237
    %v250 = vpack.c.b16 %v240, %v239
    %v251 = vpack.c.b16 %v242, %v241
    %v252 = vpack.c.b16 %v244, %v243
    %261 = vmatprep.subr.bf16.mxu0 0
    %262 = vmatpush1.bf16.msra.mxu0 %v252
    %263 = vmatprep.subr.bf16.mxu0 0
    %264 = vmatpush1.bf16.msra.mxu0 %v251
    %265 = vmatprep.subr.bf16.mxu0 0
    %266 = vmatpush1.bf16.msra.mxu0 %v250
    %267 = vmatprep.subr.bf16.mxu0 0
    %268 = vmatpush1.bf16.msra.mxu0 %v249
    %269 = vmatprep.subr.bf16.mxu0 0
    %270 = vmatpush1.bf16.msra.mxu0 %v248
    %271 = vmatprep.subr.bf16.mxu0 0
    %272 = vmatpush1.bf16.msra.mxu0 %v247
    %273 = vmatprep.subr.bf16.mxu0 0
    %274 = vmatpush1.bf16.msra.mxu0 %v246
    %275 = vmatprep.subr.bf16.mxu0 0
    %276 = vmatpush1.bf16.msra.mxu0 %v245
    %277 = vmatprep.subr.bf16.mxu0 0
    %278 = vmatpush2.bf16.msra.mxu0 0
    %279 = vmatprep.subr.bf16.mxu0 0
    %280 = vmatpush2.bf16.msra.mxu0 0
    %281 = vmatprep.subr.bf16.mxu0 0
    %282 = vmatpush2.bf16.msra.mxu0 0
    %283 = vmatprep.subr.bf16.mxu0 0
    %284 = vmatpush2.bf16.msra.mxu0 0
    %285 = vmatprep.subr.bf16.mxu0 0
    %286 = vmatpush2.bf16.msra.mxu0 0
    %287 = vmatprep.subr.bf16.mxu0 0
    %288 = vmatpush2.bf16.msra.mxu0 0
    %289 = vmatprep.subr.bf16.mxu0 0
    %290 = vmatpush2.bf16.msra.mxu0 0
    %291 = vmatprep.subr.bf16.mxu0 0
    %292 = vmatpush2.bf16.msra.mxu0 0
    %293 = vmatprep.mubr.bf16.mxu0 0
    %294 = vmatmul.mubr.bf16.gmra.mxu0 %v188
    %v295 = vpop.f32.mrf.mxu0
    %v296 = vadd.f32 %v211, %v295
    %v297 = vpop.f32.mrf.mxu0
    %v298 = vpop.f32.mrf.mxu0
    %v299 = vadd.f32 %v211, %v298
    %v300 = vpop.f32.mrf.mxu0
    %301 = vmatprep.mubr.bf16.mxu0 0
    %302 = vmatmul.mubr.bf16.gmra.mxu0 %v189
    %v303 = vpop.f32.mrf.mxu0
    %v304 = vadd.f32 %v211, %v303
    %v305 = vpop.f32.mrf.mxu0
    %v306 = vpop.f32.mrf.mxu0
    %v307 = vadd.f32 %v211, %v306
    %v308 = vpop.f32.mrf.mxu0
    %309 = vdwg.mxu0
    %310 = vst [vmem:[#allocation8] sm:$0xff] %v296
    %311 = vst [vmem:[#allocation8 + $0x8] sm:$0xff] %v299
    %312 = vst [vmem:[#allocation8 + $0x10] sm:$0xff] %v304
    %313 = vst [vmem:[#allocation8 + $0x18] sm:$0xff] %v307
    // Predicated region
    $region34: #{tpu_custom_call.1} parent=1 // pred_check
      _
    $region35: #{tpu_custom_call.1} parent=1 // pred_check_branch
      %315 = sbr.rel (0) target = $region37
    $region36: #{tpu_custom_call.1} parent=1 // pred_region
      %s317 = ssub.s32 512, 512
      %318 = vsyncadd [#allocation4], %s317
      %s319 = sshll.u32 [#allocation8], 4
      %s320 = int_to_ptr.vmem [resolvable:$true] %s319
      %325 = dma.vmem_to_hbm [thread:$0]  %s320, 512, %s5, [#allocation4], 128, 128, 8
    $region37: #{tpu_custom_call.1} parent=1 // pred_fallthru
      _
    // Predicated region
    $region38: #{tpu_custom_call.1} parent=1 // pred_check
      _
    $region39: #{tpu_custom_call.1} parent=1 // pred_check_branch
      %327 = sbr.rel (0) target = $region41
    $region40: #{tpu_custom_call.1} parent=1 // pred_region
      %328 = dma.done [#allocation4], 512
    $region41: #{tpu_custom_call.1} parent=1 // pred_fallthru
      _
    %329 = vsyncpa [#allocation3], 1
    %330 = vsyncpa [#allocation6], 1
    %331 = vsyncpa [#allocation4], 1

// kernel: tpu_custom_call.1
$region0: #{tpu_custom_call.1}
  #allocation0 [shape = 'u32[]', space=smem, size = 0x4, offset = 0x4, fixed_abs, tag = 'smem constant byte address 0x4 - core index']
  #allocation1 [shape = 'u32[144,128]{1,0:T(1,128)}', space=vmem, size = 0x12000, scoped, tag = 'internal scratch']
  %s0 = inlined_call_operand.hbm [shape: s8[32,128], index: 0, kind: input, shape index: {}]
  %s1 = inlined_call_operand.hbm [shape: bf16[128,128], index: 1, kind: input, shape index: {}]
  %s2 = inlined_call_operand.vmem [shape: f32[1,128], index: 2, kind: input, shape index: {}]
  %s3 = inlined_call_operand.hbm [shape: bf16[128,128], index: 3, kind: input, shape index: {}]
  %s4 = inlined_call_operand.vmem [shape: f32[1,128], index: 4, kind: input, shape index: {}]
  %s5 = inlined_call_operand.hbm [shape: f32[32,128], index: 5, kind: output, shape index: {}]
  %s6 = sld [smem:[#allocation0]]
  $region42: #{tpu_custom_call.1} parent=0
    _
  %s8 = ssub.s32 1, %s6
  %s9 = scalar_select 0, %s8, %s6
  $region1: #{tpu_custom_call.1} parent=0
    #allocation2 [shape = 'u8[4096]{0}', space=vmem, size = 0x1000, scoped, tag = 'input window, operand 0, single buffered']
    #allocation3 [shape = 's32[1]{0}', space=sflag, size = 0x4, scoped, tag = 'scoped memory for tpu_custom_call.1']
    #allocation4 [shape = 's32[1]{0}', space=sflag, size = 0x4, scoped, tag = 'scoped memory for tpu_custom_call.1']
    #allocation5 [shape = 'u8[32768]{0}', space=vmem, size = 0x8000, scoped, tag = 'input window, operand 1, single buffered']
    #allocation6 [shape = 's32[1]{0}', space=sflag, size = 0x4, scoped, tag = 'scoped memory for tpu_custom_call.1']
    #allocation7 [shape = 'u8[32768]{0}', space=vmem, size = 0x8000, scoped, tag = 'input window, operand 3, single buffered']
    #allocation8 [shape = 'u8[16384]{0}', space=vmem, size = 0x4000, scoped, tag = 'output window, operand 0, single buffered']
    %10 = vsyncpa [#allocation3], 0
    %11 = vsyncpa [#allocation6], 0
    %12 = vsyncpa [#allocation4], 0
    // Predicated region
    $region2: #{tpu_custom_call.1} parent=1 // pred_check
      _
    $region3: #{tpu_custom_call.1} parent=1 // pred_check_branch
      %14 = sbr.rel (0) target = $region5
    $region4: #{tpu_custom_call.1} parent=1 // pred_region
      %s16 = ssub.s32 128, 128
      %17 = vsyncadd [#allocation3], %s16
      %s19 = sshll.u32 [#allocation2], 4
      %s20 = int_to_ptr.vmem [resolvable:$true] %s19
      %22 = dma.hbm_to_vmem [thread:$0]  %s0, 128, %s20, [#allocation3]
    $region5: #{tpu_custom_call.1} parent=1 // pred_fallthru
      _
    // Predicated region
    $region6: #{tpu_custom_call.1} parent=1 // pred_check
      _
    $region7: #{tpu_custom_call.1} parent=1 // pred_check_branch
      %24 = sbr.rel (0) target = $region9
    $region8: #{tpu_custom_call.1} parent=1 // pred_region
      %s26 = ssub.s32 1024, 1024
      %27 = vsyncadd [#allocation6], %s26
      %s28 = sshll.u32 [#allocation5], 4
      %s29 = int_to_ptr.vmem [resolvable:$true] %s28
      %34 = dma.hbm_to_vmem [thread:$0]  %s1, 1024, %s29, [#allocation6], 64, 64, 4
    $region9: #{tpu_custom_call.1} parent=1 // pred_fallthru
      _
    // Predicated region
    $region10: #{tpu_custom_call.1} parent=1 // pred_check
      _
    $region11: #{tpu_custom_call.1} parent=1 // pred_check_branch
      %36 = sbr.rel (0) target = $region13
    $region12: #{tpu_custom_call.1} parent=1 // pred_region
      _
    $region13: #{tpu_custom_call.1} parent=1 // pred_fallthru
      _
    // Predicated region
    $region14: #{tpu_custom_call.1} parent=1 // pred_check
      _
    $region15: #{tpu_custom_call.1} parent=1 // pred_check_branch
      %38 = sbr.rel (0) target = $region17
    $region16: #{tpu_custom_call.1} parent=1 // pred_region
      %s40 = ssub.s32 1024, 1024
      %41 = vsyncadd [#allocation6], %s40
      %s42 = sshll.u32 [#allocation7], 4
      %s43 = int_to_ptr.vmem [resolvable:$true] %s42
      %48 = dma.hbm_to_vmem [thread:$0]  %s3, 1024, %s43, [#allocation6], 64, 64, 4
    $region17: #{tpu_custom_call.1} parent=1 // pred_fallthru
      _
    // Predicated region
    $region18: #{tpu_custom_call.1} parent=1 // pred_check
      _
    $region19: #{tpu_custom_call.1} parent=1 // pred_check_branch
      %50 = sbr.rel (0) target = $region21
    $region20: #{tpu_custom_call.1} parent=1 // pred_region
      _
    $region21: #{tpu_custom_call.1} parent=1 // pred_fallthru
      _
    // Predicated region
    $region22: #{tpu_custom_call.1} parent=1 // pred_check
      _
    $region23: #{tpu_custom_call.1} parent=1 // pred_check_branch
      %52 = sbr.rel (0) target = $region25
    $region24: #{tpu_custom_call.1} parent=1 // pred_region
      %53 = dma.done [#allocation3], 128
    $region25: #{tpu_custom_call.1} parent=1 // pred_fallthru
      _
    // Predicated region
    $region26: #{tpu_custom_call.1} parent=1 // pred_check
      _
    $region27: #{tpu_custom_call.1} parent=1 // pred_check_branch
      %55 = sbr.rel (0) target = $region29
    $region28: #{tpu_custom_call.1} parent=1 // pred_region
      %56 = dma.done [#allocation6], 1024
    $region29: #{tpu_custom_call.1} parent=1 // pred_fallthru
      _
    // Predicated region
    $region30: #{tpu_custom_call.1} parent=1 // pred_check
      _
    $region31: #{tpu_custom_call.1} parent=1 // pred_check_branch
      %58 = sbr.rel (0) target = $region33
    $region32: #{tpu_custom_call.1} parent=1 // pred_region
      %59 = dma.done [#allocation6], 1024
    $region33: #{tpu_custom_call.1} parent=1 // pred_fallthru
      _
    %v61 = vld [vmem:[#allocation2] sm:$0xff]
    %v62 = vunpack.c.l.s8.bf16 %v61
    %v63 = vunpack.c.h.s8.bf16 %v61
    %v64 = vld [vmem:[#allocation5] sm:$0xf]
    %v65 = vld [vmem:[#allocation5 + $0x4] sm:$0xf]
    %v66 = vld [vmem:[#allocation5 + $0x8] sm:$0xf]
    %v67 = vld [vmem:[#allocation5 + $0xc] sm:$0xf]
    %v68 = vld [vmem:[#allocation5 + $0x10] sm:$0xf]
    %v69 = vld [vmem:[#allocation5 + $0x14] sm:$0xf]
    %v70 = vld [vmem:[#allocation5 + $0x18] sm:$0xf]
    %v71 = vld [vmem:[#allocation5 + $0x1c] sm:$0xf]
    %v72 = vld [vmem:[#allocation5 + $0x20] sm:$0xf]
    %v73 = vld [vmem:[#allocation5 + $0x24] sm:$0xf]
    %v74 = vld [vmem:[#allocation5 + $0x28] sm:$0xf]
    %v75 = vld [vmem:[#allocation5 + $0x2c] sm:$0xf]
    %v76 = vld [vmem:[#allocation5 + $0x30] sm:$0xf]
    %v77 = vld [vmem:[#allocation5 + $0x34] sm:$0xf]
    %v78 = vld [vmem:[#allocation5 + $0x38] sm:$0xf]
    %v79 = vld [vmem:[#allocation5 + $0x3c] sm:$0xf]
    %v80 = vld [vmem:[%s2] sm:$0x1]
    %v82 = vlaneseq
    %v83 = vshrl.u32 %v82, 7
    %v84 = vsub.s32 0, %v83
    %v85 = vrot.slane %v80, %v84
    %v103 = vunpack.c.l.b16 %v64
    %v104 = vunpack.c.l.b16 %v65
    %v105 = vunpack.c.l.b16 %v66
    %v106 = vunpack.c.l.b16 %v67
    %v107 = vunpack.c.l.b16 %v68
    %v108 = vunpack.c.l.b16 %v69
    %v109 = vunpack.c.l.b16 %v70
    %v110 = vunpack.c.l.b16 %v71
    %v111 = vunpack.c.l.b16 %v72
    %v112 = vunpack.c.l.b16 %v73
    %v113 = vunpack.c.l.b16 %v74
    %v114 = vunpack.c.l.b16 %v75
    %v115 = vunpack.c.l.b16 %v76
    %v116 = vunpack.c.l.b16 %v77
    %v117 = vunpack.c.l.b16 %v78
    %v118 = vunpack.c.l.b16 %v79
    %v119 = vpack.c.b16 %v104, %v103
    %v120 = vpack.c.b16 %v106, %v105
    %v121 = vpack.c.b16 %v108, %v107
    %v122 = vpack.c.b16 %v110, %v109
    %v123 = vpack.c.b16 %v112, %v111
    %v124 = vpack.c.b16 %v114, %v113
    %v125 = vpack.c.b16 %v116, %v115
    %v126 = vpack.c.b16 %v118, %v117
    %135 = vmatprep.subr.bf16.mxu0 0
    %136 = vmatpush1.bf16.msra.mxu0 %v126
    %137 = vmatprep.subr.bf16.mxu0 0
    %138 = vmatpush1.bf16.msra.mxu0 %v125
    %139 = vmatprep.subr.bf16.mxu0 0
    %140 = vmatpush1.bf16.msra.mxu0 %v124
    %141 = vmatprep.subr.bf16.mxu0 0
    %142 = vmatpush1.bf16.msra.mxu0 %v123
    %143 = vmatprep.subr.bf16.mxu0 0
    %144 = vmatpush1.bf16.msra.mxu0 %v122
    %145 = vmatprep.subr.bf16.mxu0 0
    %146 = vmatpush1.bf16.msra.mxu0 %v121
    %147 = vmatprep.subr.bf16.mxu0 0
    %148 = vmatpush1.bf16.msra.mxu0 %v120
    %149 = vmatprep.subr.bf16.mxu0 0
    %150 = vmatpush1.bf16.msra.mxu0 %v119
    %151 = vmatprep.subr.bf16.mxu0 0
    %152 = vmatpush2.bf16.msra.mxu0 0
    %153 = vmatprep.subr.bf16.mxu0 0
    %154 = vmatpush2.bf16.msra.mxu0 0
    %155 = vmatprep.subr.bf16.mxu0 0
    %156 = vmatpush2.bf16.msra.mxu0 0
    %157 = vmatprep.subr.bf16.mxu0 0
    %158 = vmatpush2.bf16.msra.mxu0 0
    %159 = vmatprep.subr.bf16.mxu0 0
    %160 = vmatpush2.bf16.msra.mxu0 0
    %161 = vmatprep.subr.bf16.mxu0 0
    %162 = vmatpush2.bf16.msra.mxu0 0
    %163 = vmatprep.subr.bf16.mxu0 0
    %164 = vmatpush2.bf16.msra.mxu0 0
    %165 = vmatprep.subr.bf16.mxu0 0
    %166 = vmatpush2.bf16.msra.mxu0 0
    %167 = vmatprep.mubr.bf16.mxu0 0
    %168 = vmatmul.mubr.bf16.gmra.mxu0 %v62
    %v169 = vpop.f32.mrf.mxu0
    %v170 = vadd.f32 %v85, %v169
    %v171 = vpop.f32.mrf.mxu0
    %v172 = vpop.f32.mrf.mxu0
    %v173 = vadd.f32 %v85, %v172
    %v174 = vpop.f32.mrf.mxu0
    %175 = vmatprep.mubr.bf16.mxu0 0
    %176 = vmatmul.mubr.bf16.gmra.mxu0 %v63
    %v177 = vpop.f32.mrf.mxu0
    %v178 = vadd.f32 %v85, %v177
    %v179 = vpop.f32.mrf.mxu0
    %v180 = vpop.f32.mrf.mxu0
    %v181 = vadd.f32 %v85, %v180
    %v182 = vpop.f32.mrf.mxu0
    %183 = vdwg.mxu0
    %v184 = vmax.f32 %v170, 0.0
    %v185 = vmax.f32 %v173, 0.0
    %v186 = vmax.f32 %v178, 0.0
    %v187 = vmax.f32 %v181, 0.0
    %v188 = vpack.c.bf16 %v185, %v184
    %v189 = vpack.c.bf16 %v187, %v186
    %v190 = vld [vmem:[#allocation7] sm:$0xf]
    %v191 = vld [vmem:[#allocation7 + $0x4] sm:$0xf]
    %v192 = vld [vmem:[#allocation7 + $0x8] sm:$0xf]
    %v193 = vld [vmem:[#allocation7 + $0xc] sm:$0xf]
    %v194 = vld [vmem:[#allocation7 + $0x10] sm:$0xf]
    %v195 = vld [vmem:[#allocation7 + $0x14] sm:$0xf]
    %v196 = vld [vmem:[#allocation7 + $0x18] sm:$0xf]
    %v197 = vld [vmem:[#allocation7 + $0x1c] sm:$0xf]
    %v198 = vld [vmem:[#allocation7 + $0x20] sm:$0xf]
    %v199 = vld [vmem:[#allocation7 + $0x24] sm:$0xf]
    %v200 = vld [vmem:[#allocation7 + $0x28] sm:$0xf]
    %v201 = vld [vmem:[#allocation7 + $0x2c] sm:$0xf]
    %v202 = vld [vmem:[#allocation7 + $0x30] sm:$0xf]
    %v203 = vld [vmem:[#allocation7 + $0x34] sm:$0xf]
    %v204 = vld [vmem:[#allocation7 + $0x38] sm:$0xf]
    %v205 = vld [vmem:[#allocation7 + $0x3c] sm:$0xf]
    %v206 = vld [vmem:[%s4] sm:$0x1]
    %v208 = vlaneseq
    %v209 = vshrl.u32 %v208, 7
    %v210 = vsub.s32 0, %v209
    %v211 = vrot.slane %v206, %v210
    %v229 = vunpack.c.l.b16 %v190
    %v230 = vunpack.c.l.b16 %v191
    %v231 = vunpack.c.l.b16 %v192
    %v232 = vunpack.c.l.b16 %v193
    %v233 = vunpack.c.l.b16 %v194
    %v234 = vunpack.c.l.b16 %v195
    %v235 = vunpack.c.l.b16 %v196
    %v236 = vunpack.c.l.b16 %v197
    %v237 = vunpack.c.l.b16 %v198
    %v238 = vunpack.c.l.b16 %v199
    %v239 = vunpack.c.l.b16 %v200
    %v240 = vunpack.c.l.b16 %v201
    %v241 = vunpack.c.l.b16 %v202
    %v242 = vunpack.c.l.b16 %v203
    %v243 = vunpack.c.l.b16 %v204
    %v244 = vunpack.c.l.b16 %v205
    %v245 = vpack.c.b16 %v230, %v229
    %v246 = vpack.c.b16 %v232, %v231
    %v247 = vpack.c.b16 %v234, %v233
    %v248 = vpack.c.b16 %v236, %v235
    %v249 = vpack.c.b16 %v238, %v237
    %v250 = vpack.c.b16 %v240, %v239
    %v251 = vpack.c.b16 %v242, %v241
    %v252 = vpack.c.b16 %v244, %v243
    %261 = vmatprep.subr.bf16.mxu0 0
    %262 = vmatpush1.bf16.msra.mxu0 %v252
    %263 = vmatprep.subr.bf16.mxu0 0
    %264 = vmatpush1.bf16.msra.mxu0 %v251
    %265 = vmatprep.subr.bf16.mxu0 0
    %266 = vmatpush1.bf16.msra.mxu0 %v250
    %267 = vmatprep.subr.bf16.mxu0 0
    %268 = vmatpush1.bf16.msra.mxu0 %v249
    %269 = vmatprep.subr.bf16.mxu0 0
    %270 = vmatpush1.bf16.msra.mxu0 %v248
    %271 = vmatprep.subr.bf16.mxu0 0
    %272 = vmatpush1.bf16.msra.mxu0 %v247
    %273 = vmatprep.subr.bf16.mxu0 0
    %274 = vmatpush1.bf16.msra.mxu0 %v246
    %275 = vmatprep.subr.bf16.mxu0 0
    %276 = vmatpush1.bf16.msra.mxu0 %v245
    %277 = vmatprep.subr.bf16.mxu0 0
    %278 = vmatpush2.bf16.msra.mxu0 0
    %279 = vmatprep.subr.bf16.mxu0 0
    %280 = vmatpush2.bf16.msra.mxu0 0
    %281 = vmatprep.subr.bf16.mxu0 0
    %282 = vmatpush2.bf16.msra.mxu0 0
    %283 = vmatprep.subr.bf16.mxu0 0
    %284 = vmatpush2.bf16.msra.mxu0 0
    %285 = vmatprep.subr.bf16.mxu0 0
    %286 = vmatpush2.bf16.msra.mxu0 0
    %287 = vmatprep.subr.bf16.mxu0 0
    %288 = vmatpush2.bf16.msra.mxu0 0
    %289 = vmatprep.subr.bf16.mxu0 0
    %290 = vmatpush2.bf16.msra.mxu0 0
    %291 = vmatprep.subr.bf16.mxu0 0
    %292 = vmatpush2.bf16.msra.mxu0 0
    %293 = vmatprep.mubr.bf16.mxu0 0
    %294 = vmatmul.mubr.bf16.gmra.mxu0 %v188
    %v295 = vpop.f32.mrf.mxu0
    %v296 = vadd.f32 %v211, %v295
    %v297 = vpop.f32.mrf.mxu0
    %v298 = vpop.f32.mrf.mxu0
    %v299 = vadd.f32 %v211, %v298
    %v300 = vpop.f32.mrf.mxu0
    %301 = vmatprep.mubr.bf16.mxu0 0
    %302 = vmatmul.mubr.bf16.gmra.mxu0 %v189
    %v303 = vpop.f32.mrf.mxu0
    %v304 = vadd.f32 %v211, %v303
    %v305 = vpop.f32.mrf.mxu0
    %v306 = vpop.f32.mrf.mxu0
    %v307 = vadd.f32 %v211, %v306
    %v308 = vpop.f32.mrf.mxu0
    %309 = vdwg.mxu0
    %310 = vst [vmem:[#allocation8] sm:$0xff] %v296
    %311 = vst [vmem:[#allocation8 + $0x8] sm:$0xff] %v299
    %312 = vst [vmem:[#allocation8 + $0x10] sm:$0xff] %v304
    %313 = vst [vmem:[#allocation8 + $0x18] sm:$0xff] %v307
    // Predicated region
    $region34: #{tpu_custom_call.1} parent=1 // pred_check
      _
    $region35: #{tpu_custom_call.1} parent=1 // pred_check_branch
      %315 = sbr.rel (0) target = $region37
    $region36: #{tpu_custom_call.1} parent=1 // pred_region
      %s317 = ssub.s32 512, 512
      %318 = vsyncadd [#allocation4], %s317
      %s319 = sshll.u32 [#allocation8], 4
      %s320 = int_to_ptr.vmem [resolvable:$true] %s319
      %325 = dma.vmem_to_hbm [thread:$0]  %s320, 512, %s5, [#allocation4], 128, 128, 8
    $region37: #{tpu_custom_call.1} parent=1 // pred_fallthru
      _
    // Predicated region
    $region38: #{tpu_custom_call.1} parent=1 // pred_check
      _
    $region39: #{tpu_custom_call.1} parent=1 // pred_check_branch
      %327 = sbr.rel (0) target = $region41
    $region40: #{tpu_custom_call.1} parent=1 // pred_region
      %328 = dma.done [#allocation4], 512
    $region41: #{tpu_custom_call.1} parent=1 // pred_fallthru
      _
    %329 = vsyncpa [#allocation3], 1
    %330 = vsyncpa [#allocation6], 1
    %331 = vsyncpa [#allocation4], 1

</llo_original>
